<compile_context>
chip_gen: v7x
topology: tpu7x:2x2x1
jax: 0.10.0
libtpu: 0.0.40
codegen_flags: <defaults>
</compile_context>

<pallas_src>
import jax
import jax.numpy as jnp
from jax.experimental import pallas as pl
from jax.experimental.pallas import tpu as pltpu

_LANES = 128
_MAX_BLOCK_BYTES = 1 << 20   # ~1 MiB per buffer; in+out double-buffered ~4 MiB VMEM
_TARGET_GRID = 4             # aim for >=4 grid steps so both v7x TCs get work


def _clip_boxes_kernel(x_ref, lower_ref, upper_ref, out_ref):
    # x_ref: (B, col_tile); lower/upper: (1, col_tile) — broadcast over sublanes.
    out_ref[...] = jnp.minimum(jnp.maximum(x_ref[...], lower_ref[...]),
                               upper_ref[...])


def _choose_col_tile(batch, cols, itemsize):
    if cols <= _LANES:
        return cols  # single full-extent block (cols = 4*N, still a multiple of 4)
    by_vmem = max(_LANES,
                  ((_MAX_BLOCK_BYTES // (batch * itemsize)) // _LANES) * _LANES)
    by_grid = max(_LANES,
                  pl.cdiv(pl.cdiv(cols, _TARGET_GRID), _LANES) * _LANES)
    return min(by_vmem, by_grid)


def clip_boxes(boxes, img):
    """Functional equivalent of ClipBoxes.forward (returns a new array)."""
    B, N, C4 = boxes.shape
    assert C4 == 4, "boxes last dim must be 4 ([x1, y1, x2, y2])"
    assert jnp.issubdtype(boxes.dtype, jnp.floating), "boxes must be floating point"
    _, _, height, width = img.shape  # only the static shape is used

    cols = N * 4
    itemsize = jnp.dtype(boxes.dtype).itemsize
    col_tile = _choose_col_tile(B, cols, itemsize)
    num_tiles = pl.cdiv(cols, col_tile)

    slab = boxes.reshape(B, cols)  # free contiguous reshape (layout bitcast)

    # Per-lane clamp bounds, period 4 along the flattened coordinate axis:
    #   lane%4==0 -> x1: [0, +inf)    lane%4==1 -> y1: [0, +inf)
    #   lane%4==2 -> x2: (-inf, W]    lane%4==3 -> y2: (-inf, H]
    # Depend only on static shapes => constant-folded by XLA (no extra traffic
    # beyond one tiny resident block per core).
    coord = jnp.arange(col_tile, dtype=jnp.int32) % 4
    lower = jnp.where(coord < 2, 0.0, -jnp.inf).astype(boxes.dtype)
    lower = lower.reshape(1, col_tile)
    upper = jnp.where(coord == 2, float(width),
                      jnp.where(coord == 3, float(height), jnp.inf)
                      ).astype(boxes.dtype).reshape(1, col_tile)

    out = pl.pallas_call(
        _clip_boxes_kernel,
        out_shape=jax.ShapeDtypeStruct((B, cols), boxes.dtype),
        grid=(num_tiles,),
        in_specs=[
            pl.BlockSpec((B, col_tile), lambda j: (0, j)),
            pl.BlockSpec((1, col_tile), lambda j: (0, 0)),  # bounds stay resident
            pl.BlockSpec((1, col_tile), lambda j: (0, 0)),
        ],
        out_specs=pl.BlockSpec((B, col_tile), lambda j: (0, j)),
        compiler_params=pltpu.CompilerParams(
            dimension_semantics=("parallel",),
        ),
        cost_estimate=pl.CostEstimate(
            flops=2 * B * cols,
            transcendentals=0,
            bytes_accessed=2 * B * cols * itemsize,
        ),
    )(slab, lower, upper)

    return out.reshape(B, N, 4)  # free reshape back to (B, N, 4)


def clip_boxes_ref(boxes, img):
    """Pure-JAX reference matching the PyTorch semantics."""
    _, _, height, width = img.shape
    x1 = jnp.maximum(boxes[:, :, 0], 0.0)
    y1 = jnp.maximum(boxes[:, :, 1], 0.0)
    x2 = jnp.minimum(boxes[:, :, 2], float(width))
    y2 = jnp.minimum(boxes[:, :, 3], float(height))
    return jnp.stack([x1, y1, x2, y2], axis=-1)


if __name__ == "__main__":
    key = jax.random.PRNGKey(0)
    k1, k2, k3 = jax.random.split(key, 3)

    clip_boxes_jit = jax.jit(clip_boxes)

    # --- small case (single full-extent block path) ---
    B, N = 2, 8
    C, H, W = 4, 16, 16
    boxes = jax.random.uniform(k1, (B, N, 4), dtype=jnp.float32,
                               minval=-8.0, maxval=24.0)
    img = jax.random.normal(k2, (B, C, H, W), dtype=jnp.float32)

    out = jax.block_until_ready(clip_boxes_jit(boxes, img))
    ref = clip_boxes_ref(boxes, img)
    assert out.shape == boxes.shape and out.dtype == boxes.dtype
    assert jnp.allclose(out, ref, atol=0.0, rtol=0.0), "small-case mismatch"

    # --- medium case (tiled grid + ragged partial edge block) ---
    B2, N2 = 2, 20000  # cols = 80000 -> 4 tiles of 20096 cols, last one partial
    boxes2 = jax.random.uniform(k3, (B2, N2, 4), dtype=jnp.float32,
                                minval=-8.0, maxval=24.0)
    out2 = jax.block_until_ready(clip_boxes_jit(boxes2, img))
    ref2 = clip_boxes_ref(boxes2, img)
    assert out2.shape == boxes2.shape and out2.dtype == boxes2.dtype
    assert jnp.allclose(out2, ref2, atol=0.0, rtol=0.0), "tiled-case mismatch"

    print("KERNEL_OK")
</pallas_src>

<mosaic_0001>
module attributes {stable_mosaic.version = 11 : i64} {
  func.func @_clip_boxes_kernel(%arg0: i32, %arg1: memref<2x32xf32, #tpu.memory_space<vmem>>, %arg2: memref<1x32xf32, #tpu.memory_space<vmem>>, %arg3: memref<1x32xf32, #tpu.memory_space<vmem>>, %arg4: memref<2x32xf32, #tpu.memory_space<vmem>>) attributes {dimension_semantics = [#tpu.dimension_semantics<parallel>], iteration_bounds = array<i64: 1>, scalar_prefetch = 0 : i64, scratch_operands = 0 : i64, tpu.core_type = #tpu.core_type<tc>, window_params = [{transform_indices = @transform_0, window_bounds = array<i64: 2, 32>}, {pipeline_mode = #tpu.pipeline_mode<synchronous>, transform_indices = @transform_1, window_bounds = array<i64: 1, 32>}, {pipeline_mode = #tpu.pipeline_mode<synchronous>, transform_indices = @transform_2, window_bounds = array<i64: 1, 32>}, {transform_indices = @transform_3, window_bounds = array<i64: 2, 32>}]} {
    %c0 = arith.constant 0 : index
    %c0_0 = arith.constant 0 : index
    %0 = vector.load %arg1[%c0, %c0_0] : memref<2x32xf32, #tpu.memory_space<vmem>>, vector<2x32xf32>
    %c0_1 = arith.constant 0 : index
    %c0_2 = arith.constant 0 : index
    %1 = vector.load %arg2[%c0_1, %c0_2] : memref<1x32xf32, #tpu.memory_space<vmem>>, vector<1x32xf32>
    %2 = vector.broadcast %1 : vector<1x32xf32> to vector<2x32xf32>
    %3 = arith.maximumf %0, %2 : vector<2x32xf32>
    %c0_3 = arith.constant 0 : index
    %c0_4 = arith.constant 0 : index
    %4 = vector.load %arg3[%c0_3, %c0_4] : memref<1x32xf32, #tpu.memory_space<vmem>>, vector<1x32xf32>
    %5 = vector.broadcast %4 : vector<1x32xf32> to vector<2x32xf32>
    %6 = arith.minimumf %3, %5 : vector<2x32xf32>
    %c0_5 = arith.constant 0 : index
    %c0_6 = arith.constant 0 : index
    %7 = vector.load %arg4[%c0_5, %c0_6] : memref<2x32xf32, #tpu.memory_space<vmem>>, vector<2x32xf32>
    tpu.vector_store %arg4[%c0_5, %c0_6], %6 {strides = array<i32>} : memref<2x32xf32, #tpu.memory_space<vmem>>, vector<2x32xf32>,
    return
  }
  func.func @transform_0(%arg0: i32) -> (i32, i32) {
    %c0_i32 = arith.constant 0 : i32
    %c0_i32_0 = arith.constant 0 : i32
    return %c0_i32, %arg0 : i32, i32
  }
  func.func @transform_1(%arg0: i32) -> (i32, i32) {
    %c0_i32 = arith.constant 0 : i32
    %c0_i32_0 = arith.constant 0 : i32
    %c0_i32_1 = arith.constant 0 : i32
    return %c0_i32, %c0_i32_0 : i32, i32
  }
  func.func @transform_2(%arg0: i32) -> (i32, i32) {
    %c0_i32 = arith.constant 0 : i32
    %c0_i32_0 = arith.constant 0 : i32
    %c0_i32_1 = arith.constant 0 : i32
    return %c0_i32, %c0_i32_0 : i32, i32
  }
  func.func @transform_3(%arg0: i32) -> (i32, i32) {
    %c0_i32 = arith.constant 0 : i32
    %c0_i32_0 = arith.constant 0 : i32
    return %c0_i32, %arg0 : i32, i32
  }
}

</mosaic_0001>

<llo_original>
// kernel: clip_boxes.1
$region0: #{clip_boxes.1}
  #allocation0 [shape = 'u32[]', space=smem, size = 0x4, offset = 0x4, fixed_abs, tag = 'smem constant byte address 0x4 - core index']
  #allocation1 [shape = 'u32[144,128]{1,0:T(1,128)}', space=vmem, size = 0x12000, scoped, tag = 'internal scratch']
  %s0 = inlined_call_operand.vmem [shape: f32[2,32], index: 0, kind: input, shape index: {}]
  %s1 = inlined_call_operand.vmem [shape: f32[1,32], index: 1, kind: input, shape index: {}]
  %s2 = inlined_call_operand.vmem [shape: f32[1,32], index: 2, kind: input, shape index: {}]
  %s3 = inlined_call_operand.vmem [shape: f32[2,32], index: 3, kind: output, shape index: {}]
  %s4 = sld [smem:[#allocation0]]
  $region22: #{clip_boxes.1} parent=0
    _
  %s6 = ssub.s32 1, %s4
  %s7 = scalar_select 0, %s6, %s4
  // Predicated region
  $region2: #{clip_boxes.1} parent=0 // pred_check
    _
  $region3: #{clip_boxes.1} parent=0 // pred_check_branch
    %9 = sbr.rel (0) target = $region5
  $region4: #{clip_boxes.1} parent=0 // pred_region
    _
  $region5: #{clip_boxes.1} parent=0 // pred_fallthru
    _
  // Predicated region
  $region6: #{clip_boxes.1} parent=0 // pred_check
    _
  $region7: #{clip_boxes.1} parent=0 // pred_check_branch
    %11 = sbr.rel (0) target = $region9
  $region8: #{clip_boxes.1} parent=0 // pred_region
    _
  $region9: #{clip_boxes.1} parent=0 // pred_fallthru
    _
  // Predicated region
  $region10: #{clip_boxes.1} parent=0 // pred_check
    _
  $region11: #{clip_boxes.1} parent=0 // pred_check_branch
    %13 = sbr.rel (0) target = $region13
  $region12: #{clip_boxes.1} parent=0 // pred_region
    _
  $region13: #{clip_boxes.1} parent=0 // pred_fallthru
    _
  %v14 = vld [vmem:[%s0] sm:$0x3]
  %v15 = vld [vmem:[%s1] sm:$0x1]
  %v17 = vlaneseq
  %v18 = vshrl.u32 %v17, 7
  %v19 = vsub.s32 0, %v18
  %v20 = vrot.slane %v15, %v19
  %v22 = vmax.f32 %v14, %v20
  %v23 = vld [vmem:[%s2] sm:$0x1]
  %v25 = vlaneseq
  %v26 = vshrl.u32 %v25, 7
  %v27 = vsub.s32 0, %v26
  %v28 = vrot.slane %v23, %v27
  %v30 = vmin.f32 %v22, %v28
  %vm31 = vcmask 254976
  %32 = vst.msk [vmem:[%s3] sm:$0x3] %vm31, %v30
  // Predicated region
  $region14: #{clip_boxes.1} parent=0 // pred_check
    _
  $region15: #{clip_boxes.1} parent=0 // pred_check_branch
    %34 = sbr.rel (0) target = $region17
  $region16: #{clip_boxes.1} parent=0 // pred_region
    _
  $region17: #{clip_boxes.1} parent=0 // pred_fallthru
    _
  // Predicated region
  $region18: #{clip_boxes.1} parent=0 // pred_check
    _
  $region19: #{clip_boxes.1} parent=0 // pred_check_branch
    %36 = sbr.rel (0) target = $region21
  $region20: #{clip_boxes.1} parent=0 // pred_region
    _
  $region21: #{clip_boxes.1} parent=0 // pred_fallthru
    _

</llo_original>
